<compile_context>
chip_gen: v5e
topology: v5e:2x2
jax: 0.10.0
libtpu: 0.0.40
codegen_flags: <defaults>
</compile_context>

<pallas_src>
import jax
import jax.numpy as jnp
from jax.experimental import pallas as pl
from jax.experimental.pallas import tpu as pltpu


def _pd_kernel(kp_ref, kd_ref, pos_ref, vel_ref, des_pos_ref, des_vel_ref, out_ref):
    # Scalars from SMEM.
    kp = kp_ref[0]
    kd = kd_ref[0]
    # PD law on the full (1, n) VMEM tiles, single fused store.
    out_ref[...] = (
        kp * (des_pos_ref[...] - pos_ref[...])
        + kd * (des_vel_ref[...] - vel_ref[...])
    )


def pd_controller(kp, kd, position, velocity, des_position, des_velocity):
    """JAX/Pallas equivalent of PDController.forward.

    kp, kd: shape (1,) float32
    position, velocity, des_position, des_velocity: shape (N,) float32
    returns: shape (N,) float32
    """
    n = position.shape[0]

    def _as_row(v):
        # Metadata-only reshape to (1, n); full-array blocks need no padding.
        return jnp.asarray(v, jnp.float32).reshape(1, n)

    kp = jnp.asarray(kp, jnp.float32).reshape(1)
    kd = jnp.asarray(kd, jnp.float32).reshape(1)

    smem_spec = pl.BlockSpec(memory_space=pltpu.MemorySpace.SMEM)
    vmem_spec = pl.BlockSpec(memory_space=pltpu.MemorySpace.VMEM)

    out = pl.pallas_call(
        _pd_kernel,
        out_shape=jax.ShapeDtypeStruct((1, n), jnp.float32),
        in_specs=[
            smem_spec,  # kp
            smem_spec,  # kd
            vmem_spec,  # position
            vmem_spec,  # velocity
            vmem_spec,  # des_position
            vmem_spec,  # des_velocity
        ],
        out_specs=vmem_spec,
    )(
        kp,
        kd,
        _as_row(position),
        _as_row(velocity),
        _as_row(des_position),
        _as_row(des_velocity),
    )

    return out.reshape(n)


if __name__ == "__main__":
    key = jax.random.PRNGKey(0)
    k_pos, k_vel = jax.random.split(key)

    n_joints = 12
    # Deterministic inputs matching the module's globals / shapes.
    kp = jnp.array([5.0], dtype=jnp.float32)
    kd = jnp.array([0.1], dtype=jnp.float32)
    position = jax.random.normal(k_pos, (n_joints,), dtype=jnp.float32)
    velocity = jax.random.normal(k_vel, (n_joints,), dtype=jnp.float32)
    des_position = jnp.ones((n_joints,), dtype=jnp.float32)
    des_velocity = jnp.ones((n_joints,), dtype=jnp.float32)

    tau = pd_controller(kp, kd, position, velocity, des_position, des_velocity)
    tau = jax.block_until_ready(tau)

    # Cross-check against pure-JAX reference.
    ref = kp * (des_position - position) + kd * (des_velocity - velocity)
    assert tau.shape == (n_joints,)
    assert jnp.allclose(tau, ref, atol=1e-6, rtol=1e-6)

    print("KERNEL_OK")
</pallas_src>

<mosaic_0001>
module attributes {stable_mosaic.version = 11 : i64} {
  func.func @_pd_kernel(%arg0: memref<1xf32, #tpu.memory_space<smem>>, %arg1: memref<1xf32, #tpu.memory_space<smem>>, %arg2: memref<1x12xf32, #tpu.memory_space<vmem>>, %arg3: memref<1x12xf32, #tpu.memory_space<vmem>>, %arg4: memref<1x12xf32, #tpu.memory_space<vmem>>, %arg5: memref<1x12xf32, #tpu.memory_space<vmem>>, %arg6: memref<1x12xf32, #tpu.memory_space<vmem>>) attributes {dimension_semantics = [], scalar_prefetch = 0 : i64, scratch_operands = 0 : i64, tpu.core_type = #tpu.core_type<tc>} {
    %c0 = arith.constant 0 : index
    %0 = memref.load %arg0[%c0] : memref<1xf32, #tpu.memory_space<smem>>
    %c0_0 = arith.constant 0 : index
    %1 = memref.load %arg1[%c0_0] : memref<1xf32, #tpu.memory_space<smem>>
    %c0_1 = arith.constant 0 : index
    %c0_2 = arith.constant 0 : index
    %2 = vector.load %arg4[%c0_1, %c0_2] : memref<1x12xf32, #tpu.memory_space<vmem>>, vector<1x12xf32>
    %c0_3 = arith.constant 0 : index
    %c0_4 = arith.constant 0 : index
    %3 = vector.load %arg2[%c0_3, %c0_4] : memref<1x12xf32, #tpu.memory_space<vmem>>, vector<1x12xf32>
    %4 = arith.subf %2, %3 : vector<1x12xf32>
    %5 = vector.broadcast %0 : f32 to vector<1x12xf32>
    %6 = arith.mulf %5, %4 : vector<1x12xf32>
    %c0_5 = arith.constant 0 : index
    %c0_6 = arith.constant 0 : index
    %7 = vector.load %arg5[%c0_5, %c0_6] : memref<1x12xf32, #tpu.memory_space<vmem>>, vector<1x12xf32>
    %c0_7 = arith.constant 0 : index
    %c0_8 = arith.constant 0 : index
    %8 = vector.load %arg3[%c0_7, %c0_8] : memref<1x12xf32, #tpu.memory_space<vmem>>, vector<1x12xf32>
    %9 = arith.subf %7, %8 : vector<1x12xf32>
    %10 = vector.broadcast %1 : f32 to vector<1x12xf32>
    %11 = arith.mulf %10, %9 : vector<1x12xf32>
    %12 = arith.addf %6, %11 : vector<1x12xf32>
    %c0_9 = arith.constant 0 : index
    %c0_10 = arith.constant 0 : index
    %13 = vector.load %arg6[%c0_9, %c0_10] : memref<1x12xf32, #tpu.memory_space<vmem>>, vector<1x12xf32>
    tpu.vector_store %arg6[%c0_9, %c0_10], %12 {strides = array<i32>} : memref<1x12xf32, #tpu.memory_space<vmem>>, vector<1x12xf32>,
    return
  }
}

</mosaic_0001>

<llo_original>
// kernel: tpu_custom_call.1
$region0: #{tpu_custom_call.1}
  #allocation0 [shape = 'u32[]', space=smem, size = 0x4, offset = 0x4, fixed_abs, tag = 'smem constant byte address 0x4 - core index']
  #allocation1 [shape = 'u32[72,128]{1,0:T(1,128)}', space=vmem, size = 0x9000, scoped, tag = 'internal scratch']
  #allocation2 [shape = 'f32[1]{0:T(128)S(6)}', space=smem, size = 0x200, scoped, tag = 'scoped memory for tpu_custom_call.1']
  #allocation3 [shape = 'f32[1]{0:T(128)S(6)}', space=smem, size = 0x200, scoped, tag = 'scoped memory for tpu_custom_call.1']
  %s0 = inlined_call_operand.<no memory space> [shape: f32[1], index: 0, kind: input, shape index: {}]
  %s1 = inlined_call_operand.<no memory space> [shape: f32[1], index: 1, kind: input, shape index: {}]
  %s2 = inlined_call_operand.vmem [shape: f32[1,12], index: 2, kind: input, shape index: {}]
  %s3 = inlined_call_operand.vmem [shape: f32[1,12], index: 3, kind: input, shape index: {}]
  %s4 = inlined_call_operand.vmem [shape: f32[1,12], index: 4, kind: input, shape index: {}]
  %s5 = inlined_call_operand.vmem [shape: f32[1,12], index: 5, kind: input, shape index: {}]
  %s6 = inlined_call_operand.hbm [shape: f32[1,12], index: 6, kind: output, shape index: {}]
  %s7 = sld [smem:[#allocation0]]
  $region34: #{tpu_custom_call.1} parent=0
    _
  %s9 = ssub.s32 1, %s7
  %s10 = scalar_select 0, %s9, %s7
  %11 = sst [smem:[#allocation2]] %s0
  %12 = sst [smem:[#allocation3]] %s1
  $region1: #{tpu_custom_call.1} parent=0
    #allocation4 [shape = 'u8[512]{0}', space=vmem, size = 0x400, scoped, tag = 'output window, operand 0, single buffered']
    #allocation5 [shape = 's32[1]{0}', space=sflag, size = 0x4, scoped, tag = 'scoped memory for tpu_custom_call.1']
    %13 = vsyncpa [#allocation5], 0
    // Predicated region
    $region2: #{tpu_custom_call.1} parent=1 // pred_check
      _
    $region3: #{tpu_custom_call.1} parent=1 // pred_check_branch
      %15 = sbr.rel (0) target = $region5
    $region4: #{tpu_custom_call.1} parent=1 // pred_region
      _
    $region5: #{tpu_custom_call.1} parent=1 // pred_fallthru
      _
    // Predicated region
    $region6: #{tpu_custom_call.1} parent=1 // pred_check
      _
    $region7: #{tpu_custom_call.1} parent=1 // pred_check_branch
      %17 = sbr.rel (0) target = $region9
    $region8: #{tpu_custom_call.1} parent=1 // pred_region
      _
    $region9: #{tpu_custom_call.1} parent=1 // pred_fallthru
      _
    // Predicated region
    $region10: #{tpu_custom_call.1} parent=1 // pred_check
      _
    $region11: #{tpu_custom_call.1} parent=1 // pred_check_branch
      %19 = sbr.rel (0) target = $region13
    $region12: #{tpu_custom_call.1} parent=1 // pred_region
      _
    $region13: #{tpu_custom_call.1} parent=1 // pred_fallthru
      _
    // Predicated region
    $region14: #{tpu_custom_call.1} parent=1 // pred_check
      _
    $region15: #{tpu_custom_call.1} parent=1 // pred_check_branch
      %21 = sbr.rel (0) target = $region17
    $region16: #{tpu_custom_call.1} parent=1 // pred_region
      _
    $region17: #{tpu_custom_call.1} parent=1 // pred_fallthru
      _
    // Predicated region
    $region18: #{tpu_custom_call.1} parent=1 // pred_check
      _
    $region19: #{tpu_custom_call.1} parent=1 // pred_check_branch
      %23 = sbr.rel (0) target = $region21
    $region20: #{tpu_custom_call.1} parent=1 // pred_region
      _
    $region21: #{tpu_custom_call.1} parent=1 // pred_fallthru
      _
    // Predicated region
    $region22: #{tpu_custom_call.1} parent=1 // pred_check
      _
    $region23: #{tpu_custom_call.1} parent=1 // pred_check_branch
      %25 = sbr.rel (0) target = $region25
    $region24: #{tpu_custom_call.1} parent=1 // pred_region
      _
    $region25: #{tpu_custom_call.1} parent=1 // pred_fallthru
      _
    %s26 = sld [smem:[#allocation2]]
    %s27 = sld [smem:[#allocation3]]
    %v28 = vld [vmem:[%s4] sm:$0x1]
    %v29 = vld [vmem:[%s2] sm:$0x1]
    %v30 = vsub.f32 %v28, %v29
    %v31 = vstv %s26
    %v32 = vmul.f32 %v31, %v30
    %v33 = vld [vmem:[%s5] sm:$0x1]
    %v34 = vld [vmem:[%s3] sm:$0x1]
    %v35 = vsub.f32 %v33, %v34
    %v36 = vstv %s27
    %v37 = vmul.f32 %v36, %v35
    %v38 = vadd.f32 %v32, %v37
    %vm39 = vcmask 90112
    %40 = vst.msk [vmem:[#allocation4] sm:$0x1] %vm39, %v38
    // Predicated region
    $region26: #{tpu_custom_call.1} parent=1 // pred_check
      _
    $region27: #{tpu_custom_call.1} parent=1 // pred_check_branch
      %42 = sbr.rel (0) target = $region29
    $region28: #{tpu_custom_call.1} parent=1 // pred_region
      %44 = vsyncadd [#allocation5], 0
      %s46 = sshll.u32 [#allocation4], 4
      %s47 = int_to_ptr.vmem [resolvable:$true] %s46
      %s48 = sshll.u32 %s6, 4
      %s49 = int_to_ptr.hbm [resolvable:$true] %s48
      %51 = dma.vmem_to_hbm [thread:$0]  %s47, 16, %s49, [#allocation5]
    $region29: #{tpu_custom_call.1} parent=1 // pred_fallthru
      _
    // Predicated region
    $region30: #{tpu_custom_call.1} parent=1 // pred_check
      _
    $region31: #{tpu_custom_call.1} parent=1 // pred_check_branch
      %53 = sbr.rel (0) target = $region33
    $region32: #{tpu_custom_call.1} parent=1 // pred_region
      %55 = dma.done [#allocation5], 16
    $region33: #{tpu_custom_call.1} parent=1 // pred_fallthru
      _
    %56 = vsyncpa [#allocation5], 1

</llo_original>
